<compile_context>
chip_gen: v7x
topology: tpu7x:2x2x1
jax: 0.10.0
libtpu: 0.0.40
codegen_flags: <defaults>
</compile_context>

<pallas_src>
import functools

import jax
import jax.numpy as jnp
import numpy as np
from jax.experimental import pallas as pl
from jax.experimental.pallas import tpu as pltpu


# ----------------------------- kernel ---------------------------------------
def _rmsnorm_kernel(x_ref, w_ref, o_ref, *, eps, inv_d):
    # x_ref: (block_rows, d), w_ref: (1, d) f32, o_ref: (block_rows, d)
    x = x_ref[...].astype(jnp.float32)
    # sum * (1/d) instead of mean: one VPU mul, reduce stays a single XLU op.
    ms = jnp.sum(x * x, axis=-1, keepdims=True) * inv_d
    y = x * jax.lax.rsqrt(ms + eps) * w_ref[...]
    o_ref[...] = y.astype(o_ref.dtype)


# ----------------------------- wrapper ---------------------------------------
def _choose_block_rows(rows, d, itemsize, max_block_rows=8192,
                       vmem_budget=16 << 20):
    """Largest sublane-aligned row tile fitting the VMEM budget."""
    bytes_per_row = max(1, d * itemsize)
    # in + out tiles, each double-buffered by the pipeline -> 4 live copies.
    cap = max(8, (vmem_budget // (4 * bytes_per_row)) // 8 * 8)
    br = min(max_block_rows, cap)
    if rows <= br:
        br = max(8, ((rows + 7) // 8) * 8)   # single sublane-aligned block
    return br


def rmsnorm_pallas(x, weight, eps=1e-5):
    """RMSNorm over the last axis of x. weight has shape (d_model,)."""
    orig_shape = x.shape
    d = orig_shape[-1]
    x2 = x.reshape(-1, d)
    rows = x2.shape[0]

    br = _choose_block_rows(rows, d, x2.dtype.itemsize)
    padded_rows = pl.cdiv(rows, br) * br
    if padded_rows != rows:
        x2 = jnp.pad(x2, ((0, padded_rows - rows), (0, 0)))

    w2 = weight.reshape(1, d).astype(jnp.float32)

    out = pl.pallas_call(
        functools.partial(_rmsnorm_kernel, eps=float(eps), inv_d=1.0 / d),
        out_shape=jax.ShapeDtypeStruct((padded_rows, d), x2.dtype),
        grid=(padded_rows // br,),
        in_specs=[
            pl.BlockSpec((br, d), lambda i: (i, 0)),   # row tile of activations
            pl.BlockSpec((1, d), lambda i: (0, 0)),    # broadcast weight
        ],
        out_specs=pl.BlockSpec((br, d), lambda i: (i, 0)),
        compiler_params=pltpu.CompilerParams(
            dimension_semantics=("parallel",),          # shard rows across TCs (v7x)
            vmem_limit_bytes=64 << 20,
        ),
    )(x2, w2)

    if padded_rows != rows:
        out = out[:rows]
    return out.reshape(orig_shape)


# ----------------------------- pure-JAX reference ----------------------------
def rmsnorm_ref(x, weight, eps=1e-5):
    ms = jnp.mean(x * x, axis=-1, keepdims=True)
    return x * jax.lax.rsqrt(ms + eps) * weight


# ----------------------------- main -------------------------------------------
if __name__ == "__main__":
    B, L, D = 2, 8, 32
    EPS = 1e-5                      # matches the PyTorch module default

    key = jax.random.PRNGKey(0)
    kx, kw = jax.random.split(key)
    x = jax.random.normal(kx, (B, L, D), jnp.float32)
    # PyTorch init is ones; use a non-trivial deterministic weight to exercise
    # the scale multiply as well.
    weight = 1.0 + 0.1 * jax.random.normal(kw, (D,), jnp.float32)

    out = rmsnorm_pallas(x, weight, eps=EPS)
    out = jax.block_until_ready(out)

    ref = jax.block_until_ready(rmsnorm_ref(x, weight, eps=EPS))
    np.testing.assert_allclose(np.asarray(out), np.asarray(ref),
                               rtol=1e-5, atol=1e-5)

    print("KERNEL_OK")
</pallas_src>

<mosaic_0001>
module attributes {stable_mosaic.version = 11 : i64} {
  func.func @_rmsnorm_kernel(%arg0: i32, %arg1: memref<16x32xf32, #tpu.memory_space<vmem>>, %arg2: memref<1x32xf32, #tpu.memory_space<vmem>>, %arg3: memref<16x32xf32, #tpu.memory_space<vmem>>) attributes {dimension_semantics = [#tpu.dimension_semantics<parallel>], iteration_bounds = array<i64: 1>, scalar_prefetch = 0 : i64, scratch_operands = 0 : i64, tpu.core_type = #tpu.core_type<tc>, window_params = [{transform_indices = @transform_0, window_bounds = array<i64: 16, 32>}, {pipeline_mode = #tpu.pipeline_mode<synchronous>, transform_indices = @transform_1, window_bounds = array<i64: 1, 32>}, {transform_indices = @transform_2, window_bounds = array<i64: 16, 32>}]} {
    %c0 = arith.constant 0 : index
    %c0_0 = arith.constant 0 : index
    %0 = vector.load %arg1[%c0, %c0_0] : memref<16x32xf32, #tpu.memory_space<vmem>>, vector<16x32xf32>
    %1 = arith.mulf %0, %0 : vector<16x32xf32>
    %cst = arith.constant dense<0.000000e+00> : vector<16xf32>
    %2 = vector.multi_reduction <add>, %1, %cst [1] : vector<16x32xf32> to vector<16xf32>
    %3 = vector.shape_cast %2 : vector<16xf32> to vector<16x1xf32>
    %cst_1 = arith.constant 3.125000e-02 : f32
    %4 = vector.broadcast %cst_1 : f32 to vector<16x1xf32>
    %5 = arith.mulf %3, %4 : vector<16x1xf32>
    %cst_2 = arith.constant 9.99999974E-6 : f32
    %6 = vector.broadcast %cst_2 : f32 to vector<16x1xf32>
    %7 = arith.addf %5, %6 : vector<16x1xf32>
    %8 = math.rsqrt %7 : vector<16x1xf32>
    %9 = vector.broadcast %8 : vector<16x1xf32> to vector<16x32xf32>
    %10 = arith.mulf %0, %9 : vector<16x32xf32>
    %c0_3 = arith.constant 0 : index
    %c0_4 = arith.constant 0 : index
    %11 = vector.load %arg2[%c0_3, %c0_4] : memref<1x32xf32, #tpu.memory_space<vmem>>, vector<1x32xf32>
    %12 = vector.broadcast %11 : vector<1x32xf32> to vector<16x32xf32>
    %13 = arith.mulf %10, %12 : vector<16x32xf32>
    %c0_5 = arith.constant 0 : index
    %c0_6 = arith.constant 0 : index
    %14 = vector.load %arg3[%c0_5, %c0_6] : memref<16x32xf32, #tpu.memory_space<vmem>>, vector<16x32xf32>
    tpu.vector_store %arg3[%c0_5, %c0_6], %13 {strides = array<i32>} : memref<16x32xf32, #tpu.memory_space<vmem>>, vector<16x32xf32>,
    return
  }
  func.func @transform_0(%arg0: i32) -> (i32, i32) {
    %c0_i32 = arith.constant 0 : i32
    %c0_i32_0 = arith.constant 0 : i32
    return %arg0, %c0_i32 : i32, i32
  }
  func.func @transform_1(%arg0: i32) -> (i32, i32) {
    %c0_i32 = arith.constant 0 : i32
    %c0_i32_0 = arith.constant 0 : i32
    %c0_i32_1 = arith.constant 0 : i32
    return %c0_i32, %c0_i32_0 : i32, i32
  }
  func.func @transform_2(%arg0: i32) -> (i32, i32) {
    %c0_i32 = arith.constant 0 : i32
    %c0_i32_0 = arith.constant 0 : i32
    return %arg0, %c0_i32 : i32, i32
  }
}

</mosaic_0001>

<llo_original>
// kernel: tpu_custom_call.1
$region0: #{tpu_custom_call.1}
  #allocation0 [shape = 'u32[]', space=smem, size = 0x4, offset = 0x4, fixed_abs, tag = 'smem constant byte address 0x4 - core index']
  #allocation1 [shape = 'u32[144,128]{1,0:T(1,128)}', space=vmem, size = 0x12000, scoped, tag = 'internal scratch']
  %s0 = inlined_call_operand.hbm [shape: f32[16,32], index: 0, kind: input, shape index: {}]
  %s1 = inlined_call_operand.hbm [shape: f32[1,32], index: 1, kind: input, shape index: {}]
  %s2 = inlined_call_operand.hbm [shape: f32[16,32], index: 2, kind: output, shape index: {}]
  %s3 = sld [smem:[#allocation0]]
  $region26: #{tpu_custom_call.1} parent=0
    _
  %s5 = ssub.s32 1, %s3
  %s6 = scalar_select 0, %s5, %s3
  $region1: #{tpu_custom_call.1} parent=0
    #allocation2 [shape = 'u8[8192]{0}', space=vmem, size = 0x2000, scoped, tag = 'input window, operand 0, single buffered']
    #allocation3 [shape = 's32[1]{0}', space=sflag, size = 0x4, scoped, tag = 'scoped memory for tpu_custom_call.1']
    #allocation4 [shape = 's32[1]{0}', space=sflag, size = 0x4, scoped, tag = 'scoped memory for tpu_custom_call.1']
    #allocation5 [shape = 'u8[512]{0}', space=vmem, size = 0x400, scoped, tag = 'input window, operand 1, single buffered']
    #allocation6 [shape = 's32[1]{0}', space=sflag, size = 0x4, scoped, tag = 'scoped memory for tpu_custom_call.1']
    #allocation7 [shape = 'u8[8192]{0}', space=vmem, size = 0x2000, scoped, tag = 'output window, operand 0, single buffered']
    %7 = vsyncpa [#allocation3], 0
    %8 = vsyncpa [#allocation6], 0
    %9 = vsyncpa [#allocation4], 0
    // Predicated region
    $region2: #{tpu_custom_call.1} parent=1 // pred_check
      _
    $region3: #{tpu_custom_call.1} parent=1 // pred_check_branch
      %11 = sbr.rel (0) target = $region5
    $region4: #{tpu_custom_call.1} parent=1 // pred_region
      %s13 = ssub.s32 256, 256
      %14 = vsyncadd [#allocation3], %s13
      %s15 = sshll.u32 [#allocation2], 4
      %s16 = int_to_ptr.vmem [resolvable:$true] %s15
      %21 = dma.hbm_to_vmem [thread:$0]  %s0, 256, %s16, [#allocation3], 128, 128, 8
    $region5: #{tpu_custom_call.1} parent=1 // pred_fallthru
      _
    // Predicated region
    $region6: #{tpu_custom_call.1} parent=1 // pred_check
      _
    $region7: #{tpu_custom_call.1} parent=1 // pred_check_branch
      %23 = sbr.rel (0) target = $region9
    $region8: #{tpu_custom_call.1} parent=1 // pred_region
      %s25 = ssub.s32 16, 16
      %26 = vsyncadd [#allocation6], %s25
      %s28 = sshll.u32 [#allocation5], 4
      %s29 = int_to_ptr.vmem [resolvable:$true] %s28
      %31 = dma.hbm_to_vmem [thread:$0]  %s1, 16, %s29, [#allocation6]
    $region9: #{tpu_custom_call.1} parent=1 // pred_fallthru
      _
    // Predicated region
    $region10: #{tpu_custom_call.1} parent=1 // pred_check
      _
    $region11: #{tpu_custom_call.1} parent=1 // pred_check_branch
      %33 = sbr.rel (0) target = $region13
    $region12: #{tpu_custom_call.1} parent=1 // pred_region
      %34 = dma.done [#allocation3], 256
    $region13: #{tpu_custom_call.1} parent=1 // pred_fallthru
      _
    // Predicated region
    $region14: #{tpu_custom_call.1} parent=1 // pred_check
      _
    $region15: #{tpu_custom_call.1} parent=1 // pred_check_branch
      %36 = sbr.rel (0) target = $region17
    $region16: #{tpu_custom_call.1} parent=1 // pred_region
      %37 = dma.done [#allocation6], 16
    $region17: #{tpu_custom_call.1} parent=1 // pred_fallthru
      _
    %v38 = vld [vmem:[#allocation2] sm:$0xff]
    %v39 = vld [vmem:[#allocation2 + $0x8] sm:$0xff]
    %v40 = vmul.f32 %v38, %v38
    %v41 = vmul.f32 %v39, %v39
    %vm42 = vcmask 261120
    %v43 = vsel %vm42, %v40, 0.0
    %44 = vadd.xlane.f32.xlu0 %v43
    %v45 = vpop.xlane.xlu0 %44
    %v46 = vsel %vm42, %v41, 0.0
    %47 = vadd.xlane.f32.xlu0 %v46
    %v48 = vpop.xlane.xlu0 %47
    %v49 = vmul.f32 %v45, 0.03125
    %v50 = vmul.f32 %v48, 0.03125
    %v51 = vadd.f32 %v49, 1e-05
    %v52 = vadd.f32 %v50, 1e-05
    %v53 = vrsqrt.pop %v51
    %v54 = vrsqrt.pop %v52
    %v55 = vmul.f32 %v38, %v53
    %v56 = vmul.f32 %v39, %v54
    %v57 = vld [vmem:[#allocation5] sm:$0x1]
    %v59 = vlaneseq
    %v60 = vshrl.u32 %v59, 7
    %v61 = vsub.s32 0, %v60
    %v62 = vrot.slane %v57, %v61
    %v64 = vmul.f32 %v55, %v62
    %v65 = vmul.f32 %v56, %v62
    %66 = vst.msk [vmem:[#allocation7] sm:$0xff] %vm42, %v64
    %67 = vst.msk [vmem:[#allocation7 + $0x8] sm:$0xff] %vm42, %v65
    // Predicated region
    $region18: #{tpu_custom_call.1} parent=1 // pred_check
      _
    $region19: #{tpu_custom_call.1} parent=1 // pred_check_branch
      %69 = sbr.rel (0) target = $region21
    $region20: #{tpu_custom_call.1} parent=1 // pred_region
      %s71 = ssub.s32 256, 256
      %72 = vsyncadd [#allocation4], %s71
      %s73 = sshll.u32 [#allocation7], 4
      %s74 = int_to_ptr.vmem [resolvable:$true] %s73
      %79 = dma.vmem_to_hbm [thread:$0]  %s74, 256, %s2, [#allocation4], 128, 128, 8
    $region21: #{tpu_custom_call.1} parent=1 // pred_fallthru
      _
    // Predicated region
    $region22: #{tpu_custom_call.1} parent=1 // pred_check
      _
    $region23: #{tpu_custom_call.1} parent=1 // pred_check_branch
      %81 = sbr.rel (0) target = $region25
    $region24: #{tpu_custom_call.1} parent=1 // pred_region
      %82 = dma.done [#allocation4], 256
    $region25: #{tpu_custom_call.1} parent=1 // pred_fallthru
      _
    %83 = vsyncpa [#allocation3], 1
    %84 = vsyncpa [#allocation6], 1
    %85 = vsyncpa [#allocation4], 1

</llo_original>
